<compile_context>
chip_gen: v5e
topology: v5e:2x2
jax: 0.10.0
libtpu: 0.0.40
codegen_flags: <defaults>
</compile_context>

<pallas_src>
import jax
import jax.numpy as jnp
from jax.experimental import pallas as pl
from jax.experimental.pallas import tpu as pltpu

_LANE = 128
_TARGET_X_TILE_BYTES = 4 * 1024 * 1024   # per x tile (hard cap, see _pick_tiles)
_VMEM_LIMIT_FLOOR = 16 << 20
_VMEM_LIMIT_CEIL = 48 << 20              # stay well under v7x 64 MiB per-TC VMEM


def _sublane_for(itemsize: int) -> int:
    """Native rows-per-vreg for the dtype: f32 -> 8, bf16 -> 16, int8/fp8 -> 32."""
    return {4: 8, 2: 16, 1: 32}.get(int(itemsize), 8)


def _build_encoding(d_model: int, max_len: int) -> jnp.ndarray:
    """Deterministic sinusoidal encoding, matching the PyTorch __init__ exactly."""
    assert d_model % 2 == 0, "PositionalEncoder requires an even d_model"
    pos = jnp.arange(max_len, dtype=jnp.float32)[:, None]               # (max_len, 1)
    exponents = jnp.arange(0, d_model, 2, dtype=jnp.float32) / (-d_model)
    angle_rates = jnp.power(10000.0, exponents)                         # (d_model/2,)
    angles = pos * angle_rates                                          # (max_len, d_model/2)
    enc = jnp.zeros((max_len, d_model), dtype=jnp.float32)
    enc = enc.at[:, 0::2].set(jnp.sin(angles))
    enc = enc.at[:, 1::2].set(jnp.cos(angles))
    return enc[None, :, :]                                              # (1, max_len, d_model)


def _pe_add_kernel(x_ref, enc_ref, o_ref):
    # x_ref: (row_tile, col_tile); enc_ref: (1, col_tile) broadcast over rows
    # (sublanes).  The add promotes to the wider dtype in the VPU (huge VALU
    # slack on this HBM-bound kernel), then rounds to the output dtype.
    o_ref[...] = (x_ref[...] + enc_ref[...]).astype(o_ref.dtype)


def _pick_tiles(n_rows: int, n_cols: int, itemsize: int):
    """Lane-dense 2-D tiles with a hard cap of _TARGET_X_TILE_BYTES per x tile."""
    sublane = _sublane_for(itemsize)
    target_elems = max(_LANE * sublane, _TARGET_X_TILE_BYTES // itemsize)

    # 1) Column (lane) tile. Cap it assuming at least `sublane` rows so the
    #    tile can never exceed the byte target (fixes the old 8x overshoot).
    max_col = max(_LANE, (target_elems // sublane // _LANE) * _LANE)
    if n_cols <= max_col:
        col_tile = n_cols                                    # full dim: always legal
    else:
        col_tile = max_col
        if n_cols % _LANE == 0:
            # Prefer a lane-aligned divisor of n_cols: no ragged final slab,
            # no masked vst.msk partial stores on the edge blocks.
            c = max_col
            while c >= _LANE:
                if n_cols % c == 0:
                    col_tile = c
                    break
                c -= _LANE

    # 2) Row (sublane) tile: fill the remaining budget, dtype-aware floor.
    rows_budget = max(sublane, target_elems // col_tile)
    if n_rows <= rows_budget:
        row_tile = n_rows                                    # full dim: always legal
    else:
        row_tile = max(sublane, (rows_budget // sublane) * sublane)

    # 3) v7x megacore: if everything landed in one grid step, split an axis
    #    (lane-dense first) so the grid has >= 2 parallel steps.
    #    No-op on single-TC v5e/v6e.
    if row_tile >= n_rows and col_tile >= n_cols:
        if n_cols >= 2 * _LANE:
            col_tile = max(_LANE, ((n_cols // 2) // _LANE) * _LANE)
        elif n_rows >= 2 * sublane:
            row_tile = max(sublane, ((n_rows // 2) // sublane) * sublane)

    return row_tile, col_tile


def positional_encoder_forward(x: jnp.ndarray,
                               encoding: jnp.ndarray,
                               *,
                               out_dtype=None,
                               donate_x: bool = False) -> jnp.ndarray:
    """x: (B, S, D); encoding: (1, max_len, D). Returns x + encoding[:, :S, :].

    out_dtype defaults to result_type(x, encoding) (PyTorch promotion rule).
    Pass out_dtype=x.dtype (e.g. bf16) for a reduced-HBM-traffic fast path.
    donate_x=True adds input_output_aliases={0: 0} when dtypes allow it.
    """
    B, S, D = x.shape
    assert encoding.ndim == 3 and encoding.shape[0] == 1 and encoding.shape[2] == D, (
        "encoding must have shape (1, max_len, d_model) with d_model == x.shape[-1]")
    assert S <= encoding.shape[1], f"sequence length {S} exceeds max_len {encoding.shape[1]}"

    out_dtype = (jnp.result_type(x.dtype, encoding.dtype)
                 if out_dtype is None else jnp.dtype(out_dtype))

    # Glue (free in XLA): slice / cast the table, flatten to a lane-dense 2-D view.
    # Do NOT pre-upcast x here (would double its HBM traffic for bf16 inputs).
    enc2 = encoding[:, :S, :].astype(out_dtype).reshape(1, S * D)   # (1, S*D)
    x2 = x.reshape(B, S * D)                                        # (B, S*D)
    cols = S * D

    row_tile, col_tile = _pick_tiles(B, cols, x2.dtype.itemsize)
    n_row = pl.cdiv(B, row_tile)
    n_col = pl.cdiv(cols, col_tile)

    # Explicit scoped-VMEM budget: double-buffered x/out/enc tiles + headroom.
    x_tile_bytes = row_tile * col_tile * x2.dtype.itemsize
    out_tile_bytes = row_tile * col_tile * out_dtype.itemsize
    enc_tile_bytes = col_tile * enc2.dtype.itemsize
    vmem_need = 2 * (x_tile_bytes + out_tile_bytes + enc_tile_bytes) + (4 << 20)
    vmem_limit = int(min(max(vmem_need, _VMEM_LIMIT_FLOOR), _VMEM_LIMIT_CEIL))

    cost = pl.CostEstimate(
        flops=B * cols,
        transcendentals=0,
        bytes_accessed=B * cols * (x2.dtype.itemsize + out_dtype.itemsize)
        + cols * enc2.dtype.itemsize,
    )

    aliases = {}
    if donate_x and out_dtype == x2.dtype:
        aliases = {0: 0}   # write the result over x; halves HBM footprint

    out2 = pl.pallas_call(
        _pe_add_kernel,
        out_shape=jax.ShapeDtypeStruct((B, cols), out_dtype),
        grid_spec=pltpu.PrefetchScalarGridSpec(
            num_scalar_prefetch=0,
            grid=(n_col, n_row),  # rows fastest -> encoding block reused across rows
            in_specs=[
                pl.BlockSpec((row_tile, col_tile), lambda jc, ir: (ir, jc)),  # x tile
                pl.BlockSpec((1, col_tile), lambda jc, ir: (0, jc)),          # encoding slab
            ],
            out_specs=pl.BlockSpec((row_tile, col_tile), lambda jc, ir: (ir, jc)),
        ),
        compiler_params=pltpu.CompilerParams(
            # TODO(synk): verify in an xprof trace that v7x shards this grid
            # across both TensorCores; if not, switch the leading axis to
            # pltpu.CORE_PARALLEL.
            dimension_semantics=("parallel", "parallel"),
            vmem_limit_bytes=vmem_limit,
        ),
        cost_estimate=cost,
        input_output_aliases=aliases,
    )(x2, enc2)

    # TODO(synk): at the graph level this broadcast-add is best fused into its
    # producer/consumer to save one full HBM round-trip of the activation
    # tensor; kept standalone here to preserve the module boundary.
    return out2.reshape(B, S, D)


if __name__ == "__main__":
    # Small shapes consistent with the module's forward: (batch, seq, d_model)
    B, S, D = 2, 8, 32
    MAX_LEN = 16

    key = jax.random.PRNGKey(0)
    x = jax.random.normal(key, (B, S, D), dtype=jnp.float32)

    encoding = _build_encoding(d_model=D, max_len=MAX_LEN)

    out = positional_encoder_forward(x, encoding)
    out = jax.block_until_ready(out)

    # Sanity check against a plain-JAX reference of the same forward pass.
    ref = x + encoding[:, :S, :]
    assert out.shape == (B, S, D)
    assert out.dtype == ref.dtype
    assert jnp.allclose(out, ref, atol=1e-6), "mismatch vs reference"

    print("KERNEL_OK")
</pallas_src>

<mosaic_0001>
module attributes {stable_mosaic.version = 11 : i64} {
  func.func @_pe_add_kernel(%arg0: i32, %arg1: i32, %arg2: memref<2x128xf32, #tpu.memory_space<vmem>>, %arg3: memref<1x128xf32, #tpu.memory_space<vmem>>, %arg4: memref<2x128xf32, #tpu.memory_space<vmem>>) attributes {dimension_semantics = [#tpu.dimension_semantics<parallel>, #tpu.dimension_semantics<parallel>], iteration_bounds = array<i64: 2, 1>, scalar_prefetch = 0 : i64, scratch_operands = 0 : i64, tpu.core_type = #tpu.core_type<tc>, window_params = [{transform_indices = @transform_0, window_bounds = array<i64: 2, 128>}, {transform_indices = @transform_1, window_bounds = array<i64: 1, 128>}, {transform_indices = @transform_2, window_bounds = array<i64: 2, 128>}]} {
    %c0 = arith.constant 0 : index
    %c0_0 = arith.constant 0 : index
    %0 = vector.load %arg2[%c0, %c0_0] : memref<2x128xf32, #tpu.memory_space<vmem>>, vector<2x128xf32>
    %c0_1 = arith.constant 0 : index
    %c0_2 = arith.constant 0 : index
    %1 = vector.load %arg3[%c0_1, %c0_2] : memref<1x128xf32, #tpu.memory_space<vmem>>, vector<1x128xf32>
    %2 = vector.broadcast %1 : vector<1x128xf32> to vector<2x128xf32>
    %3 = arith.addf %0, %2 : vector<2x128xf32>
    %c0_3 = arith.constant 0 : index
    %c0_4 = arith.constant 0 : index
    %4 = vector.load %arg4[%c0_3, %c0_4] : memref<2x128xf32, #tpu.memory_space<vmem>>, vector<2x128xf32>
    tpu.vector_store %arg4[%c0_3, %c0_4], %3 {strides = array<i32>} : memref<2x128xf32, #tpu.memory_space<vmem>>, vector<2x128xf32>,
    return
  }
  func.func @transform_0(%arg0: i32, %arg1: i32) -> (i32, i32) {
    %c0_i32 = arith.constant 0 : i32
    return %arg1, %arg0 : i32, i32
  }
  func.func @transform_1(%arg0: i32, %arg1: i32) -> (i32, i32) {
    %c0_i32 = arith.constant 0 : i32
    %c0_i32_0 = arith.constant 0 : i32
    return %c0_i32, %arg0 : i32, i32
  }
  func.func @transform_2(%arg0: i32, %arg1: i32) -> (i32, i32) {
    %c0_i32 = arith.constant 0 : i32
    return %arg1, %arg0 : i32, i32
  }
}

</mosaic_0001>

<llo_original>
// kernel: tpu_custom_call.1
$region0: #{tpu_custom_call.1}
  #allocation0 [shape = 'u32[]', space=smem, size = 0x4, offset = 0x4, fixed_abs, tag = 'smem constant byte address 0x4 - core index']
  #allocation1 [shape = 'u32[72,128]{1,0:T(1,128)}', space=vmem, size = 0x9000, scoped, tag = 'internal scratch']
  %s0 = inlined_call_operand.hbm [shape: f32[2,256], index: 0, kind: input, shape index: {}]
  %s1 = inlined_call_operand.hbm [shape: f32[1,256], index: 1, kind: input, shape index: {}]
  %s2 = inlined_call_operand.hbm [shape: f32[2,256], index: 2, kind: output, shape index: {}]
  %s3 = sld [smem:[#allocation0]]
  $region49: #{tpu_custom_call.1} parent=0
    _
  %s5 = ssub.s32 1, %s3
  %s6 = scalar_select 0, %s5, %s3
  $region1: #{tpu_custom_call.1} parent=0
    #allocation2 [shape = 'u8[2048]{0}', space=vmem, size = 0x800, scoped, tag = 'input window, operand 0']
    #allocation3 [shape = 's32[2]{0}', space=sflag, size = 0x8, scoped, tag = 'scoped memory for tpu_custom_call.1']
    #allocation4 [shape = 's32[2]{0}', space=sflag, size = 0x8, scoped, tag = 'scoped memory for tpu_custom_call.1']
    #allocation5 [shape = 'u8[1024]{0}', space=vmem, size = 0x400, scoped, tag = 'input window, operand 1']
    #allocation6 [shape = 's32[2]{0}', space=sflag, size = 0x8, scoped, tag = 'scoped memory for tpu_custom_call.1']
    #allocation7 [shape = 'u8[2048]{0}', space=vmem, size = 0x800, scoped, tag = 'output window, operand 0']
    %7 = vsyncpa [#allocation3], 0
    %s8 = scalar_lea.sflag [#allocation3], 1
    %9 = vsyncpa %s8, 0
    %10 = vsyncpa [#allocation6], 0
    %s11 = scalar_lea.sflag [#allocation6], 1
    %12 = vsyncpa %s11, 0
    %13 = vsyncpa [#allocation4], 0
    %s14 = scalar_lea.sflag [#allocation4], 1
    %15 = vsyncpa %s14, 0
    loop: start=0, step=1, limit=4
    $region2: #{tpu_custom_call.1} parent=1 // loop_pre_header
      _
    $region3: #{tpu_custom_call.1} parent=1 // loop_header
      %s17 = sphi 0, %s21
      %p18 = scmp.ge.s32.totalorder %s17, 4
      %s24 = sphi 0, %s36
      %s25 = sphi 0, %s32
      %s26 = sphi 0, %s24
      %s27 = sphi 0, %s25
      %s28 = sphi 0, %s26
      %s29 = sphi 0, %s27
      %s41 = sphi 0, %s43
      %s44 = sphi 0, %s41
      %s45 = sphi 0, %s44
      %s61 = sphi 0, %s45
      %s67 = sphi 0, %s69
      %s70 = sphi 0, %s67
      %s71 = sphi 0, %s70
      %s87 = sphi 0, %s71
      %s95 = sphi 0, %s97
      %s98 = sphi 0, %s95
      %s99 = sphi 0, %s98
      %s115 = sphi 0, %s99
    $region4: #{tpu_custom_call.1} parent=1 // loop_header_branch
      %20 = sbr.rel (%p18) target = $region8
    $region5: #{tpu_custom_call.1} parent=1 // loop_body
      %s22 = ssub.s32 %s17, 1
      %s23 = ssub.s32 %s17, 2
      %s30 = sadd.s32 1, %s25
      %p31 = scmp.ge.s32.totalorder %s30, 1
      %s32 = scalar_select %p31, 0, %s30
      %s33 = sadd.s32 1, %s24
      %s34 = scalar_select %p31, %s33, %s24
      %p35 = scmp.ge.s32.totalorder %s34, 2
      %s36 = scalar_select %p35, 0, %s34
      %s37 = ssub.s32 %s25, %s32
      %s38 = ssub.s32 %s24, %s36
      %s39 = sor.u32 %s37, %s38
      %p40 = scmp.eq.s32.totalorder %s39, 0
      %s42 = sadd.s32 %s41, 1
      %s43 = scalar_select %p40, %s41, %s42
      %p46 = pneg %p40
      %p47 = scmp.eq.s32.totalorder %s17, 1
      %p48 = por %p46, %p47
      %p49 = scmp.ne.s32.totalorder %s41, %s44
      %p50 = scmp.eq.s32.totalorder %s17, 0
      %p51 = por %p49, %p50
      %p52 = scmp.ne.s32.totalorder %s41, %s44
      %p53 = scmp.eq.s32.totalorder %s22, 1
      %p54 = por %p52, %p53
      %p55 = scmp.ne.s32.totalorder %s44, %s45
      %p56 = scmp.eq.s32.totalorder %s22, 0
      %p57 = por %p55, %p56
      %p58 = scmp.ne.s32.totalorder %s44, %s45
      %p59 = scmp.eq.s32.totalorder %s23, 1
      %p60 = por %p58, %p59
      %p62 = scmp.ne.s32.totalorder %s45, %s61
      %p63 = scmp.eq.s32.totalorder %s23, 0
      %p64 = por %p62, %p63
      %s65 = ssub.s32 %s24, %s36
      %p66 = scmp.eq.s32.totalorder %s65, 0
      %s68 = sadd.s32 %s67, 1
      %s69 = scalar_select %p66, %s67, %s68
      %p72 = pneg %p66
      %p73 = scmp.eq.s32.totalorder %s17, 1
      %p74 = por %p72, %p73
      %p75 = scmp.ne.s32.totalorder %s67, %s70
      %p76 = scmp.eq.s32.totalorder %s17, 0
      %p77 = por %p75, %p76
      %p78 = scmp.ne.s32.totalorder %s67, %s70
      %p79 = scmp.eq.s32.totalorder %s22, 1
      %p80 = por %p78, %p79
      %p81 = scmp.ne.s32.totalorder %s70, %s71
      %p82 = scmp.eq.s32.totalorder %s22, 0
      %p83 = por %p81, %p82
      %p84 = scmp.ne.s32.totalorder %s70, %s71
      %p85 = scmp.eq.s32.totalorder %s23, 1
      %p86 = por %p84, %p85
      %p88 = scmp.ne.s32.totalorder %s71, %s87
      %p89 = scmp.eq.s32.totalorder %s23, 0
      %p90 = por %p88, %p89
      %s91 = ssub.s32 %s25, %s32
      %s92 = ssub.s32 %s24, %s36
      %s93 = sor.u32 %s91, %s92
      %p94 = scmp.eq.s32.totalorder %s93, 0
      %s96 = sadd.s32 %s95, 1
      %s97 = scalar_select %p94, %s95, %s96
      %p100 = pneg %p94
      %p101 = scmp.eq.s32.totalorder %s17, 1
      %p102 = por %p100, %p101
      %p103 = scmp.ne.s32.totalorder %s95, %s98
      %p104 = scmp.eq.s32.totalorder %s17, 0
      %p105 = por %p103, %p104
      %p106 = scmp.ne.s32.totalorder %s95, %s98
      %p107 = scmp.eq.s32.totalorder %s22, 1
      %p108 = por %p106, %p107
      %p109 = scmp.ne.s32.totalorder %s98, %s99
      %p110 = scmp.eq.s32.totalorder %s22, 0
      %p111 = por %p109, %p110
      %p112 = scmp.ne.s32.totalorder %s98, %s99
      %p113 = scmp.eq.s32.totalorder %s23, 1
      %p114 = por %p112, %p113
      %p116 = scmp.ne.s32.totalorder %s99, %s115
      %p117 = scmp.eq.s32.totalorder %s23, 0
      %p118 = por %p116, %p117
      %p119 = scmp.le.s32.totalorder 1, %s17
      %p120 = scmp.lt.s32.totalorder %s17, 3
      %p121 = pnand %p119, %p120
      %p122 = pneg %p121
      // Predicated region
      $region9: #{tpu_custom_call.1} parent=5 // pred_check
        _
      $region10: #{tpu_custom_call.1} parent=5 // pred_check_branch
        %124 = sbr.rel (%p121) target = $region12
      $region11: #{tpu_custom_call.1} parent=5 // pred_region
        %s125 = ssub.s32 %s17, 1
      $region12: #{tpu_custom_call.1} parent=5 // pred_fallthru
        _
      %p126 = scmp.lt.s32.totalorder %s17, 2
      // Predicated region
      $region13: #{tpu_custom_call.1} parent=5 // pred_check
        %p127 = pneg %p126
      $region14: #{tpu_custom_call.1} parent=5 // pred_check_branch
        %129 = sbr.rel (%p127) target = $region16
      $region15: #{tpu_custom_call.1} parent=5 // pred_region
        // Predicated region
        $region17: #{tpu_custom_call.1} parent=15 // pred_check
          %p130 = pneg %p51
        $region18: #{tpu_custom_call.1} parent=15 // pred_check_branch
          %132 = sbr.rel (%p130) target = $region20
        $region19: #{tpu_custom_call.1} parent=15 // pred_region
          %s133 = sand.u32 %s41, 1
          %s134 = scalar_lea.sflag [#allocation3], %s133
          %s135 = sand.u32 %s41, 1
          %s136 = smul.addr %s135, 2
          %s137 = scalar_lea.vmem [#allocation2], %s136
          %139 = vsyncadd %s134, 0
          %s140 = smul.addr %s25, 2
          %s141 = sadd.s32 %s24, %s140
          %s142 = smul.addr %s141, 2
          %s143 = scalar_lea.hbm %s0, %s142
          %s145 = sshll.u32 %s143, 4
          %s146 = int_to_ptr.hbm [resolvable:$true] %s145
          %s147 = sshll.u32 %s137, 4
          %s148 = int_to_ptr.vmem [resolvable:$true] %s147
          %150 = dma.hbm_to_vmem [thread:$0]  %s146, 32, %s148, %s134
        $region20: #{tpu_custom_call.1} parent=15 // pred_fallthru
          _
        // Predicated region
        $region21: #{tpu_custom_call.1} parent=15 // pred_check
          %p151 = pneg %p77
        $region22: #{tpu_custom_call.1} parent=15 // pred_check_branch
          %153 = sbr.rel (%p151) target = $region24
        $region23: #{tpu_custom_call.1} parent=15 // pred_region
          %s154 = sand.u32 %s67, 1
          %s155 = scalar_lea.sflag [#allocation6], %s154
          %s156 = sand.u32 %s67, 1
          %s157 = scalar_lea.vmem [#allocation5], %s156
          %159 = vsyncadd %s155, 0
          %s160 = scalar_lea.hbm %s1, %s24
          %s162 = sshll.u32 %s160, 4
          %s163 = int_to_ptr.hbm [resolvable:$true] %s162
          %s164 = sshll.u32 %s157, 4
          %s165 = int_to_ptr.vmem [resolvable:$true] %s164
          %167 = dma.hbm_to_vmem [thread:$0]  %s163, 16, %s165, %s155
        $region24: #{tpu_custom_call.1} parent=15 // pred_fallthru
          _
      $region16: #{tpu_custom_call.1} parent=5 // pred_fallthru
        _
      %p168 = scmp.le.s32.totalorder 1, %s17
      %p169 = scmp.lt.s32.totalorder %s17, 3
      %p170 = pnand %p168, %p169
      %p171 = pneg %p170
      // Predicated region
      $region25: #{tpu_custom_call.1} parent=5 // pred_check
        _
      $region26: #{tpu_custom_call.1} parent=5 // pred_check_branch
        %173 = sbr.rel (%p170) target = $region28
      $region27: #{tpu_custom_call.1} parent=5 // pred_region
        %s174 = ssub.s32 %s17, 1
        %s175 = sand.u32 %s44, 1
        %s176 = scalar_lea.sflag [#allocation3], %s175
        %s177 = sand.u32 %s44, 1
        %s178 = smul.addr %s177, 2
        %s179 = scalar_lea.vmem [#allocation2], %s178
        // Predicated region
        $region29: #{tpu_custom_call.1} parent=27 // pred_check
          %p180 = pneg %p57
        $region30: #{tpu_custom_call.1} parent=27 // pred_check_branch
          %182 = sbr.rel (%p180) target = $region32
        $region31: #{tpu_custom_call.1} parent=27 // pred_region
          %184 = dma.done %s176, 32
        $region32: #{tpu_custom_call.1} parent=27 // pred_fallthru
          _
        %s185 = sand.u32 %s70, 1
        %s186 = scalar_lea.sflag [#allocation6], %s185
        %s187 = sand.u32 %s70, 1
        %s188 = scalar_lea.vmem [#allocation5], %s187
        // Predicated region
        $region33: #{tpu_custom_call.1} parent=27 // pred_check
          %p189 = pneg %p83
        $region34: #{tpu_custom_call.1} parent=27 // pred_check_branch
          %191 = sbr.rel (%p189) target = $region36
        $region35: #{tpu_custom_call.1} parent=27 // pred_region
          %193 = dma.done %s186, 16
        $region36: #{tpu_custom_call.1} parent=27 // pred_fallthru
          _
        %s194 = sand.u32 %s44, 1
        %s195 = scalar_lea.sflag [#allocation3], %s194
        %s196 = sand.u32 %s44, 1
        %s197 = smul.addr %s196, 2
        %s198 = scalar_lea.vmem [#allocation2], %s197
        %p199 = pneg %p57
        %p200 = pneg %p54
        %s201 = sand.u32 %s70, 1
        %s202 = scalar_lea.sflag [#allocation6], %s201
        %s203 = sand.u32 %s70, 1
        %s204 = scalar_lea.vmem [#allocation5], %s203
        %p205 = pneg %p83
        %p206 = pneg %p80
        %p207 = pneg %p111
        %p208 = pneg %p108
        %s209 = sand.u32 %s98, 1
        %s210 = scalar_lea.sflag [#allocation4], %s209
        %s211 = sand.u32 %s98, 1
        %s212 = smul.addr %s211, 2
        %s213 = scalar_lea.vmem [#allocation7], %s212
        %v214 = vld [vmem:[%s179] sm:$0x3]
        %v215 = vld [vmem:[%s188] sm:$0x1]
        %v217 = vperm.slane %v215, 0
        %v219 = vadd.f32 %v214, %v217
        %220 = vst [vmem:[%s213] sm:$0x3] %v219
        %s221 = sand.u32 %s98, 1
        %s222 = scalar_lea.sflag [#allocation4], %s221
        %s223 = sand.u32 %s98, 1
        %s224 = smul.addr %s223, 2
        %s225 = scalar_lea.vmem [#allocation7], %s224
        // Predicated region
        $region37: #{tpu_custom_call.1} parent=27 // pred_check
          %p226 = pneg %p108
        $region38: #{tpu_custom_call.1} parent=27 // pred_check_branch
          %228 = sbr.rel (%p226) target = $region40
        $region39: #{tpu_custom_call.1} parent=27 // pred_region
          %230 = vsyncadd %s222, 0
          %s231 = smul.addr %s27, 2
          %s232 = sadd.s32 %s26, %s231
          %s233 = smul.addr %s232, 2
          %s234 = scalar_lea.hbm %s2, %s233
          %s236 = sshll.u32 %s225, 4
          %s237 = int_to_ptr.vmem [resolvable:$true] %s236
          %s238 = sshll.u32 %s234, 4
          %s239 = int_to_ptr.hbm [resolvable:$true] %s238
          %241 = dma.vmem_to_hbm [thread:$0]  %s237, 32, %s239, %s222
        $region40: #{tpu_custom_call.1} parent=27 // pred_fallthru
          _
      $region28: #{tpu_custom_call.1} parent=5 // pred_fallthru
        _
      %p242 = scmp.le.s32.totalorder 2, %s17
      // Predicated region
      $region41: #{tpu_custom_call.1} parent=5 // pred_check
        %p243 = pneg %p242
      $region42: #{tpu_custom_call.1} parent=5 // pred_check_branch
        %245 = sbr.rel (%p243) target = $region44
      $region43: #{tpu_custom_call.1} parent=5 // pred_region
        %s246 = ssub.s32 %s17, 2
        // Predicated region
        $region45: #{tpu_custom_call.1} parent=43 // pred_check
          %p247 = pneg %p114
        $region46: #{tpu_custom_call.1} parent=43 // pred_check_branch
          %249 = sbr.rel (%p247) target = $region48
        $region47: #{tpu_custom_call.1} parent=43 // pred_region
          %s250 = sand.u32 %s99, 1
          %s251 = scalar_lea.sflag [#allocation4], %s250
          %s252 = sand.u32 %s99, 1
          %s253 = smul.addr %s252, 2
          %s254 = scalar_lea.vmem [#allocation7], %s253
          %256 = dma.done %s251, 32
        $region48: #{tpu_custom_call.1} parent=43 // pred_fallthru
          _
      $region44: #{tpu_custom_call.1} parent=5 // pred_fallthru
        _
    $region6: #{tpu_custom_call.1} parent=1 // loop_footer
      %s21 = sadd.s32 1, %s17
    $region7: #{tpu_custom_call.1} parent=1 // loop_footer_branch
      %16 = sbr.rel target = $region3
    $region8: #{tpu_custom_call.1} parent=1 // loop_exit
      _
    %257 = vsyncpa [#allocation3], 1
    %s258 = scalar_lea.sflag [#allocation3], 1
    %259 = vsyncpa %s258, 1
    %260 = vsyncpa [#allocation6], 1
    %s261 = scalar_lea.sflag [#allocation6], 1
    %262 = vsyncpa %s261, 1
    %263 = vsyncpa [#allocation4], 1
    %s264 = scalar_lea.sflag [#allocation4], 1
    %265 = vsyncpa %s264, 1

</llo_original>
